<compile_context>
chip_gen: v5e
topology: v5e:2x2
jax: 0.10.0
libtpu: 0.0.40
codegen_flags: <defaults>
</compile_context>

<pallas_src>
import jax
import jax.numpy as jnp
from jax.experimental import pallas as pl
from jax.experimental.pallas import tpu as pltpu

EPS = 1e-5
_MIN_GRID_STEPS = 4          # keep v7x's 2 TCs + the pipeline busy
_TILE_CANDIDATES = (2048, 1536, 1024, 768, 512, 384, 256, 128, 64, 32, 16, 8)


def _round_up(v, m):
    return ((v + m - 1) // m) * m


def _vmem_budget_bytes():
    """Generation-aware VMEM budget used for tile sizing."""
    try:
        cap = int(pltpu.get_tpu_info().vmem_capacity_bytes)
    except Exception:
        cap = 64 * 1024 * 1024                      # conservative if query unavailable
    if cap >= 96 * 1024 * 1024:                     # v5e / v6e: 128 MiB physical
        return 96 * 1024 * 1024
    return 44 * 1024 * 1024                         # v7x: 64 MiB physical


def _choose_tile_m(m, h, c_pad, in_item, out_item, budget):
    """Pick the row-tile size TM.

    Preference order (per perf review):
      1. fits VMEM (single-buffered resident weight/bias + double-buffered
         x / out tiles),
      2. leaves >= _MIN_GRID_STEPS grid steps without dropping below 256 rows
         (HBM roofline falls off fast below ~256-512 rows),
      3. divides M exactly (no ragged tail) as long as it stays within 2x of
         the largest viable tile,
      4. otherwise the largest viable tile (ragged last tile is fine).
    """
    resident = h * c_pad * in_item + c_pad * 4

    def fits(tm):
        return resident + 2 * tm * (h * in_item + c_pad * out_item) <= budget

    cands = [t for t in _TILE_CANDIDATES if fits(t)]
    if not cands:
        cands = [8]

    viable = [t for t in cands if t >= 256 and pl.cdiv(m, t) >= _MIN_GRID_STEPS]
    if not viable:
        viable = cands                              # small problem: take what fits
    tm_max = viable[0]
    for t in viable:                                # prefer an exact divisor of M
        if 2 * t >= tm_max and m % t == 0:
            return t
    return min(tm_max, _round_up(max(m, 1), 8))     # never tile past the problem


def _seqwise_kernel(x_ref, w_ref, b_ref, o_ref):
    # x_ref: (TM, H) streamed row tile; w_ref: (H, C_pad) resident folded weight;
    # b_ref: (1, C_pad) resident f32 bias; o_ref: (TM, C_pad).
    acc = jnp.dot(x_ref[...], w_ref[...], preferred_element_type=jnp.float32)
    o_ref[...] = (acc + b_ref[...]).astype(o_ref.dtype)


def _build_call(m, h, c_pad, tm, out_dtype, single_buffer_resident, vmem_limit, cost):
    if single_buffer_resident:
        # Constant index_map -> the default double buffer is a dead allocation.
        w_spec = pl.BlockSpec((h, c_pad), lambda i: (0, 0), pipeline_mode=pl.Buffered(1))
        b_spec = pl.BlockSpec((1, c_pad), lambda i: (0, 0), pipeline_mode=pl.Buffered(1))
    else:
        w_spec = pl.BlockSpec((h, c_pad), lambda i: (0, 0))
        b_spec = pl.BlockSpec((1, c_pad), lambda i: (0, 0))
    return pl.pallas_call(
        _seqwise_kernel,
        out_shape=jax.ShapeDtypeStruct((m, c_pad), out_dtype),
        grid=(pl.cdiv(m, tm),),                          # ragged last tile, no row pad
        in_specs=[
            pl.BlockSpec((tm, h), lambda i: (i, 0)),     # streamed row tiles
            w_spec,                                      # resident folded weight
            b_spec,                                      # resident f32 bias
        ],
        out_specs=pl.BlockSpec((tm, c_pad), lambda i: (i, 0)),
        compiler_params=pltpu.CompilerParams(
            dimension_semantics=("parallel",),           # v7x: shard rows across 2 TCs
            vmem_limit_bytes=vmem_limit,
        ),
        cost_estimate=cost,
    )


def sequence_wise(x, gamma, beta, running_mean, running_var, weight,
                  eps=EPS, compute_dtype=None, tile_m=None, return_padded=False):
    """SequenceWise(BatchNorm1d(H) -> Linear(H, C, bias=False)), eval mode.

    x: (T, N, H); weight: (C, H) (PyTorch Linear convention). Returns (T, N, C),
    or the lane-padded (T, N, C_pad) slab when return_padded=True so a
    downstream consumer (e.g. log_softmax) can fuse the column slice.
    compute_dtype: optional matmul dtype for x / w_eff (e.g. jnp.bfloat16 to
    halve the dominant HBM read); accumulation and bias stay f32.
    """
    t, n, h = x.shape
    c = weight.shape[0]
    m = t * n

    # ---- one-time O(H*C) eval-mode BN fold, done in f32 by XLA outside the kernel ----
    inv_std = jax.lax.rsqrt(running_var.astype(jnp.float32) + eps)
    scale = gamma.astype(jnp.float32) * inv_std                                   # (H,)
    shift = beta.astype(jnp.float32) - running_mean.astype(jnp.float32) * scale   # (H,)
    w_f32 = weight.astype(jnp.float32)                                            # (C, H)
    w_eff = (w_f32 * scale[None, :]).T                                            # (H, C)
    bias = shift @ w_f32.T                                                        # (C,)

    # ---- lane-dense output: pad the class dim to a multiple of 128 ----
    # TODO(synk): round c_pad to 256 on v6e/v7x if this ever becomes MXU-bound (bf16 + large C).
    c_pad = max(128, _round_up(c, 128))
    if c_pad != c:
        w_eff = jnp.pad(w_eff, ((0, 0), (0, c_pad - c)))
        bias = jnp.pad(bias, (0, c_pad - c))

    if compute_dtype is None:
        compute_dtype = x.dtype
    compute_dtype = jnp.dtype(compute_dtype)
    out_dtype = x.dtype

    w_eff = w_eff.astype(compute_dtype)
    bias2 = bias.reshape(1, c_pad).astype(jnp.float32)
    x2d = x.reshape(m, h).astype(compute_dtype)          # no row padding

    in_item = compute_dtype.itemsize
    out_item = jnp.dtype(out_dtype).itemsize
    budget = _vmem_budget_bytes()
    if tile_m is None:
        tm = _choose_tile_m(m, h, c_pad, in_item, out_item, budget)
    else:
        tm = min(_round_up(int(tile_m), 8), _round_up(max(m, 1), 8))
    vmem_limit = budget + 8 * 1024 * 1024

    cost = pl.CostEstimate(
        flops=2 * m * h * c_pad,
        transcendentals=0,
        bytes_accessed=m * h * in_item + h * c_pad * in_item + m * c_pad * out_item,
    )

    try:
        out2d = _build_call(m, h, c_pad, tm, out_dtype, True, vmem_limit, cost)(
            x2d, w_eff, bias2)
    except Exception:
        # pipeline_mode=Buffered(1) rejected on this jax version -> default buffering.
        out2d = _build_call(m, h, c_pad, tm, out_dtype, False, vmem_limit, cost)(
            x2d, w_eff, bias2)

    if return_padded:
        return out2d.reshape(t, n, c_pad)
    return out2d[:, :c].reshape(t, n, c)


def _reference(x, gamma, beta, mean, var, weight, eps=EPS):
    t, n, h = x.shape
    x2 = x.reshape(t * n, h).astype(jnp.float32)
    xn = (x2 - mean) / jnp.sqrt(var + eps) * gamma + beta
    y = xn @ weight.astype(jnp.float32).T
    return y.reshape(t, n, -1)


def _make_inputs(key, t, n, h, c):
    kx, kg, kb, km, kv, kw = jax.random.split(key, 6)
    x = jax.random.normal(kx, (t, n, h), dtype=jnp.float32)
    gamma = jax.random.normal(kg, (h,), dtype=jnp.float32) * 0.1 + 1.0
    beta = jax.random.normal(kb, (h,), dtype=jnp.float32) * 0.1
    mean = jax.random.normal(km, (h,), dtype=jnp.float32) * 0.1
    var = jax.random.uniform(kv, (h,), dtype=jnp.float32, minval=0.5, maxval=1.5)
    weight = jax.random.normal(kw, (c, h), dtype=jnp.float32) / jnp.sqrt(h)  # Linear(H, C)
    return x, gamma, beta, mean, var, weight


if __name__ == "__main__":
    key = jax.random.PRNGKey(0)
    k1, k2 = jax.random.split(key)

    # Case 1: single tile, small square shapes.
    T, N, H, C = 8, 2, 32, 32
    args = _make_inputs(k1, T, N, H, C)
    out = jax.block_until_ready(sequence_wise(*args))
    ref = _reference(*args)
    assert out.shape == (T, N, C), out.shape
    assert jnp.allclose(out, ref, atol=1e-4, rtol=1e-4), float(jnp.max(jnp.abs(out - ref)))

    # Case 2: multi-tile grid with a ragged last tile (M=160, TM=64), H not a
    # multiple of 128, C < 128 (lane-padded output) -> exercises the un-padded
    # row grid and masked partial store.
    T2, N2, H2, C2 = 40, 4, 96, 29
    args2 = _make_inputs(k2, T2, N2, H2, C2)
    out2 = jax.block_until_ready(sequence_wise(*args2, tile_m=64))
    ref2 = _reference(*args2)
    assert out2.shape == (T2, N2, C2), out2.shape
    assert jnp.allclose(out2, ref2, atol=1e-4, rtol=1e-4), float(jnp.max(jnp.abs(out2 - ref2)))

    # Case 3: bf16 matmul path (halves the dominant HBM read; f32 accumulation kept).
    out3 = jax.block_until_ready(
        sequence_wise(*args2, compute_dtype=jnp.bfloat16, tile_m=64))
    assert out3.shape == (T2, N2, C2), out3.shape
    assert jnp.allclose(out3, ref2, atol=5e-2, rtol=5e-2), float(jnp.max(jnp.abs(out3 - ref2)))

    print("KERNEL_OK")
</pallas_src>

<mosaic_0001>
module attributes {stable_mosaic.version = 11 : i64} {
  func.func @_seqwise_kernel(%arg0: i32, %arg1: memref<16x32xf32, #tpu.memory_space<vmem>>, %arg2: memref<32x128xf32, #tpu.memory_space<vmem>>, %arg3: memref<1x128xf32, #tpu.memory_space<vmem>>, %arg4: memref<16x128xf32, #tpu.memory_space<vmem>>) attributes {dimension_semantics = [#tpu.dimension_semantics<parallel>], iteration_bounds = array<i64: 1>, scalar_prefetch = 0 : i64, scratch_operands = 0 : i64, tpu.core_type = #tpu.core_type<tc>, window_params = [{transform_indices = @transform_0, window_bounds = array<i64: 16, 32>}, {pipeline_mode = #tpu.pipeline_mode<synchronous>, transform_indices = @transform_1, window_bounds = array<i64: 32, 128>}, {pipeline_mode = #tpu.pipeline_mode<synchronous>, transform_indices = @transform_2, window_bounds = array<i64: 1, 128>}, {transform_indices = @transform_3, window_bounds = array<i64: 16, 128>}]} {
    %c0 = arith.constant 0 : index
    %c0_0 = arith.constant 0 : index
    %0 = vector.load %arg1[%c0, %c0_0] : memref<16x32xf32, #tpu.memory_space<vmem>>, vector<16x32xf32>
    %c0_1 = arith.constant 0 : index
    %c0_2 = arith.constant 0 : index
    %1 = vector.load %arg2[%c0_1, %c0_2] : memref<32x128xf32, #tpu.memory_space<vmem>>, vector<32x128xf32>
    %cst = arith.constant dense<0.000000e+00> : vector<16x128xf32>
    %2 = tpu.matmul %0, %1, %cst {dimension_numbers = #tpu.dot_dimension_numbers<[1], [0], [0], [1], [0, 0, 1, 1], [], []>} : vector<16x32xf32>, vector<32x128xf32>, vector<16x128xf32> -> vector<16x128xf32>
    %c0_3 = arith.constant 0 : index
    %c0_4 = arith.constant 0 : index
    %3 = vector.load %arg3[%c0_3, %c0_4] : memref<1x128xf32, #tpu.memory_space<vmem>>, vector<1x128xf32>
    %4 = vector.broadcast %3 : vector<1x128xf32> to vector<16x128xf32>
    %5 = arith.addf %2, %4 : vector<16x128xf32>
    %c0_5 = arith.constant 0 : index
    %c0_6 = arith.constant 0 : index
    %6 = vector.load %arg4[%c0_5, %c0_6] : memref<16x128xf32, #tpu.memory_space<vmem>>, vector<16x128xf32>
    tpu.vector_store %arg4[%c0_5, %c0_6], %5 {strides = array<i32>} : memref<16x128xf32, #tpu.memory_space<vmem>>, vector<16x128xf32>,
    return
  }
  func.func @transform_0(%arg0: i32) -> (i32, i32) {
    %c0_i32 = arith.constant 0 : i32
    %c0_i32_0 = arith.constant 0 : i32
    return %arg0, %c0_i32 : i32, i32
  }
  func.func @transform_1(%arg0: i32) -> (i32, i32) {
    %c0_i32 = arith.constant 0 : i32
    %c0_i32_0 = arith.constant 0 : i32
    %c0_i32_1 = arith.constant 0 : i32
    return %c0_i32, %c0_i32_0 : i32, i32
  }
  func.func @transform_2(%arg0: i32) -> (i32, i32) {
    %c0_i32 = arith.constant 0 : i32
    %c0_i32_0 = arith.constant 0 : i32
    %c0_i32_1 = arith.constant 0 : i32
    return %c0_i32, %c0_i32_0 : i32, i32
  }
  func.func @transform_3(%arg0: i32) -> (i32, i32) {
    %c0_i32 = arith.constant 0 : i32
    %c0_i32_0 = arith.constant 0 : i32
    return %arg0, %c0_i32 : i32, i32
  }
}

module attributes {stable_mosaic.version = 11 : i64} {
  func.func @_seqwise_kernel(%arg0: i32, %arg1: memref<16x32xf32, #tpu.memory_space<vmem>>, %arg2: memref<32x128xf32, #tpu.memory_space<vmem>>, %arg3: memref<1x128xf32, #tpu.memory_space<vmem>>, %arg4: memref<16x128xf32, #tpu.memory_space<vmem>>) attributes {dimension_semantics = [#tpu.dimension_semantics<parallel>], iteration_bounds = array<i64: 1>, scalar_prefetch = 0 : i64, scratch_operands = 0 : i64, tpu.core_type = #tpu.core_type<tc>, window_params = [{transform_indices = @transform_0, window_bounds = array<i64: 16, 32>}, {pipeline_mode = #tpu.pipeline_mode<synchronous>, transform_indices = @transform_1, window_bounds = array<i64: 32, 128>}, {pipeline_mode = #tpu.pipeline_mode<synchronous>, transform_indices = @transform_2, window_bounds = array<i64: 1, 128>}, {transform_indices = @transform_3, window_bounds = array<i64: 16, 128>}]} {
    %c0 = arith.constant 0 : index
    %c0_0 = arith.constant 0 : index
    %0 = vector.load %arg1[%c0, %c0_0] : memref<16x32xf32, #tpu.memory_space<vmem>>, vector<16x32xf32>
    %c0_1 = arith.constant 0 : index
    %c0_2 = arith.constant 0 : index
    %1 = vector.load %arg2[%c0_1, %c0_2] : memref<32x128xf32, #tpu.memory_space<vmem>>, vector<32x128xf32>
    %cst = arith.constant dense<0.000000e+00> : vector<16x128xf32>
    %2 = tpu.matmul %0, %1, %cst {dimension_numbers = #tpu.dot_dimension_numbers<[1], [0], [0], [1], [0, 0, 1, 1], [], []>} : vector<16x32xf32>, vector<32x128xf32>, vector<16x128xf32> -> vector<16x128xf32>
    %c0_3 = arith.constant 0 : index
    %c0_4 = arith.constant 0 : index
    %3 = vector.load %arg3[%c0_3, %c0_4] : memref<1x128xf32, #tpu.memory_space<vmem>>, vector<1x128xf32>
    %4 = vector.broadcast %3 : vector<1x128xf32> to vector<16x128xf32>
    %5 = arith.addf %2, %4 : vector<16x128xf32>
    %c0_5 = arith.constant 0 : index
    %c0_6 = arith.constant 0 : index
    %6 = vector.load %arg4[%c0_5, %c0_6] : memref<16x128xf32, #tpu.memory_space<vmem>>, vector<16x128xf32>
    tpu.vector_store %arg4[%c0_5, %c0_6], %5 {strides = array<i32>} : memref<16x128xf32, #tpu.memory_space<vmem>>, vector<16x128xf32>,
    return
  }
  func.func @transform_0(%arg0: i32) -> (i32, i32) {
    %c0_i32 = arith.constant 0 : i32
    %c0_i32_0 = arith.constant 0 : i32
    return %arg0, %c0_i32 : i32, i32
  }
  func.func @transform_1(%arg0: i32) -> (i32, i32) {
    %c0_i32 = arith.constant 0 : i32
    %c0_i32_0 = arith.constant 0 : i32
    %c0_i32_1 = arith.constant 0 : i32
    return %c0_i32, %c0_i32_0 : i32, i32
  }
  func.func @transform_2(%arg0: i32) -> (i32, i32) {
    %c0_i32 = arith.constant 0 : i32
    %c0_i32_0 = arith.constant 0 : i32
    %c0_i32_1 = arith.constant 0 : i32
    return %c0_i32, %c0_i32_0 : i32, i32
  }
  func.func @transform_3(%arg0: i32) -> (i32, i32) {
    %c0_i32 = arith.constant 0 : i32
    %c0_i32_0 = arith.constant 0 : i32
    return %arg0, %c0_i32 : i32, i32
  }
}

</mosaic_0001>

<llo_original>
// kernel: tpu_custom_call.1
$region0: #{tpu_custom_call.1}
  #allocation0 [shape = 'u32[]', space=smem, size = 0x4, offset = 0x4, fixed_abs, tag = 'smem constant byte address 0x4 - core index']
  #allocation1 [shape = 'u32[72,128]{1,0:T(1,128)}', space=vmem, size = 0x9000, scoped, tag = 'internal scratch']
  %s0 = inlined_call_operand.hbm [shape: f32[16,32], index: 0, kind: input, shape index: {}]
  %s1 = inlined_call_operand.hbm [shape: f32[32,128], index: 1, kind: input, shape index: {}]
  %s2 = inlined_call_operand.vmem [shape: f32[1,128], index: 2, kind: input, shape index: {}]
  %s3 = inlined_call_operand.hbm [shape: f32[16,128], index: 3, kind: output, shape index: {}]
  %s4 = sld [smem:[#allocation0]]
  $region30: #{tpu_custom_call.1} parent=0
    _
  %s6 = ssub.s32 1, %s4
  %s7 = scalar_select 0, %s6, %s4
  $region1: #{tpu_custom_call.1} parent=0
    #allocation2 [shape = 'u8[8192]{0}', space=vmem, size = 0x2000, scoped, tag = 'input window, operand 0, single buffered']
    #allocation3 [shape = 's32[1]{0}', space=sflag, size = 0x4, scoped, tag = 'scoped memory for tpu_custom_call.1']
    #allocation4 [shape = 's32[1]{0}', space=sflag, size = 0x4, scoped, tag = 'scoped memory for tpu_custom_call.1']
    #allocation5 [shape = 'u8[16384]{0}', space=vmem, size = 0x4000, scoped, tag = 'input window, operand 1, single buffered']
    #allocation6 [shape = 's32[1]{0}', space=sflag, size = 0x4, scoped, tag = 'scoped memory for tpu_custom_call.1']
    #allocation7 [shape = 'u8[8192]{0}', space=vmem, size = 0x2000, scoped, tag = 'output window, operand 0, single buffered']
    %8 = vsyncpa [#allocation3], 0
    %9 = vsyncpa [#allocation6], 0
    %10 = vsyncpa [#allocation4], 0
    // Predicated region
    $region2: #{tpu_custom_call.1} parent=1 // pred_check
      _
    $region3: #{tpu_custom_call.1} parent=1 // pred_check_branch
      %12 = sbr.rel (0) target = $region5
    $region4: #{tpu_custom_call.1} parent=1 // pred_region
      %14 = vsyncadd [#allocation3], 0
      %s15 = sshll.u32 %s0, 4
      %s16 = int_to_ptr.hbm [resolvable:$true] %s15
      %s17 = sshll.u32 [#allocation2], 4
      %s18 = int_to_ptr.vmem [resolvable:$true] %s17
      %23 = dma.hbm_to_vmem [thread:$0]  %s16, 256, %s18, [#allocation3], 128, 128, 8
    $region5: #{tpu_custom_call.1} parent=1 // pred_fallthru
      _
    // Predicated region
    $region6: #{tpu_custom_call.1} parent=1 // pred_check
      _
    $region7: #{tpu_custom_call.1} parent=1 // pred_check_branch
      %25 = sbr.rel (0) target = $region9
    $region8: #{tpu_custom_call.1} parent=1 // pred_region
      %27 = vsyncadd [#allocation6], 0
      %s28 = sshll.u32 %s1, 4
      %s29 = int_to_ptr.hbm [resolvable:$true] %s28
      %s30 = sshll.u32 [#allocation5], 4
      %s31 = int_to_ptr.vmem [resolvable:$true] %s30
      %36 = dma.hbm_to_vmem [thread:$0]  %s29, 512, %s31, [#allocation6], 128, 128, 8
    $region9: #{tpu_custom_call.1} parent=1 // pred_fallthru
      _
    // Predicated region
    $region10: #{tpu_custom_call.1} parent=1 // pred_check
      _
    $region11: #{tpu_custom_call.1} parent=1 // pred_check_branch
      %38 = sbr.rel (0) target = $region13
    $region12: #{tpu_custom_call.1} parent=1 // pred_region
      _
    $region13: #{tpu_custom_call.1} parent=1 // pred_fallthru
      _
    // Predicated region
    $region14: #{tpu_custom_call.1} parent=1 // pred_check
      _
    $region15: #{tpu_custom_call.1} parent=1 // pred_check_branch
      %40 = sbr.rel (0) target = $region17
    $region16: #{tpu_custom_call.1} parent=1 // pred_region
      %42 = dma.done [#allocation3], 256
    $region17: #{tpu_custom_call.1} parent=1 // pred_fallthru
      _
    // Predicated region
    $region18: #{tpu_custom_call.1} parent=1 // pred_check
      _
    $region19: #{tpu_custom_call.1} parent=1 // pred_check_branch
      %44 = sbr.rel (0) target = $region21
    $region20: #{tpu_custom_call.1} parent=1 // pred_region
      %46 = dma.done [#allocation6], 512
    $region21: #{tpu_custom_call.1} parent=1 // pred_fallthru
      _
    %v47 = vld [vmem:[#allocation2] sm:$0xff]
    %v48 = vld [vmem:[#allocation2 + $0x8] sm:$0xff]
    %v49 = vld [vmem:[#allocation5] sm:$0xff]
    %v50 = vld [vmem:[#allocation5 + $0x8] sm:$0xff]
    %v51 = vld [vmem:[#allocation5 + $0x10] sm:$0xff]
    %v52 = vld [vmem:[#allocation5 + $0x18] sm:$0xff]
    %v53 = vld [vmem:[%s2] sm:$0x1]
    %v55 = vperm.slane %v53, 0
    %vm57 = vcmask 261120
    %v59 = vsel %vm57, %v47, 0
    %v62 = vsel %vm57, %v48, 0
    %64 = vmatpush.msra.mxu0 0.0
    %65 = vmatpush.msra.mxu0 0.0
    %66 = vmatpush.msra.mxu0 0.0
    %67 = vmatpush.msra.mxu0 0.0
    %68 = vmatpush.msra.mxu0 0.0
    %69 = vmatpush.msra.mxu0 0.0
    %70 = vmatpush.msra.mxu0 0.0
    %71 = vmatpush.msra.mxu0 0.0
    %72 = vmatpush.msra.mxu0 0.0
    %73 = vmatpush.msra.mxu0 0.0
    %74 = vmatpush.msra.mxu0 0.0
    %75 = vmatpush.msra.mxu0 0.0
    %76 = vmatpush.msra.mxu0 %v52
    %77 = vmatpush.msra.mxu0 %v51
    %78 = vmatpush.msra.mxu0 %v50
    %79 = vmatpush.msra.mxu0 %v49
    %80 = vmatmul.f32.gmra.mxu0 %v59
    %v81 = vpop.f32.mrf.mxu0
    %v82 = vadd.f32 %v55, %v81
    %83 = vmatmul.f32.gmra.mxu0 %v62
    %v84 = vpop.f32.mrf.mxu0
    %v85 = vadd.f32 %v55, %v84
    %86 = vdwg.mxu0
    %87 = vst [vmem:[#allocation7] sm:$0xff] %v82
    %88 = vst [vmem:[#allocation7 + $0x8] sm:$0xff] %v85
    // Predicated region
    $region22: #{tpu_custom_call.1} parent=1 // pred_check
      _
    $region23: #{tpu_custom_call.1} parent=1 // pred_check_branch
      %90 = sbr.rel (0) target = $region25
    $region24: #{tpu_custom_call.1} parent=1 // pred_region
      %92 = vsyncadd [#allocation4], 0
      %s93 = sshll.u32 [#allocation7], 4
      %s94 = int_to_ptr.vmem [resolvable:$true] %s93
      %s95 = sshll.u32 %s3, 4
      %s96 = int_to_ptr.hbm [resolvable:$true] %s95
      %101 = dma.vmem_to_hbm [thread:$0]  %s94, 256, %s96, [#allocation4], 128, 128, 8
    $region25: #{tpu_custom_call.1} parent=1 // pred_fallthru
      _
    // Predicated region
    $region26: #{tpu_custom_call.1} parent=1 // pred_check
      _
    $region27: #{tpu_custom_call.1} parent=1 // pred_check_branch
      %103 = sbr.rel (0) target = $region29
    $region28: #{tpu_custom_call.1} parent=1 // pred_region
      %105 = dma.done [#allocation4], 256
    $region29: #{tpu_custom_call.1} parent=1 // pred_fallthru
      _
    %106 = vsyncpa [#allocation3], 1
    %107 = vsyncpa [#allocation6], 1
    %108 = vsyncpa [#allocation4], 1

// kernel: tpu_custom_call.1
$region0: #{tpu_custom_call.1}
  #allocation0 [shape = 'u32[]', space=smem, size = 0x4, offset = 0x4, fixed_abs, tag = 'smem constant byte address 0x4 - core index']
  #allocation1 [shape = 'u32[72,128]{1,0:T(1,128)}', space=vmem, size = 0x9000, scoped, tag = 'internal scratch']
  %s0 = inlined_call_operand.hbm [shape: f32[16,32], index: 0, kind: input, shape index: {}]
  %s1 = inlined_call_operand.hbm [shape: f32[32,128], index: 1, kind: input, shape index: {}]
  %s2 = inlined_call_operand.vmem [shape: f32[1,128], index: 2, kind: input, shape index: {}]
  %s3 = inlined_call_operand.hbm [shape: f32[16,128], index: 3, kind: output, shape index: {}]
  %s4 = sld [smem:[#allocation0]]
  $region30: #{tpu_custom_call.1} parent=0
    _
  %s6 = ssub.s32 1, %s4
  %s7 = scalar_select 0, %s6, %s4
  $region1: #{tpu_custom_call.1} parent=0
    #allocation2 [shape = 'u8[8192]{0}', space=vmem, size = 0x2000, scoped, tag = 'input window, operand 0, single buffered']
    #allocation3 [shape = 's32[1]{0}', space=sflag, size = 0x4, scoped, tag = 'scoped memory for tpu_custom_call.1']
    #allocation4 [shape = 's32[1]{0}', space=sflag, size = 0x4, scoped, tag = 'scoped memory for tpu_custom_call.1']
    #allocation5 [shape = 'u8[16384]{0}', space=vmem, size = 0x4000, scoped, tag = 'input window, operand 1, single buffered']
    #allocation6 [shape = 's32[1]{0}', space=sflag, size = 0x4, scoped, tag = 'scoped memory for tpu_custom_call.1']
    #allocation7 [shape = 'u8[8192]{0}', space=vmem, size = 0x2000, scoped, tag = 'output window, operand 0, single buffered']
    %8 = vsyncpa [#allocation3], 0
    %9 = vsyncpa [#allocation6], 0
    %10 = vsyncpa [#allocation4], 0
    // Predicated region
    $region2: #{tpu_custom_call.1} parent=1 // pred_check
      _
    $region3: #{tpu_custom_call.1} parent=1 // pred_check_branch
      %12 = sbr.rel (0) target = $region5
    $region4: #{tpu_custom_call.1} parent=1 // pred_region
      %14 = vsyncadd [#allocation3], 0
      %s15 = sshll.u32 %s0, 4
      %s16 = int_to_ptr.hbm [resolvable:$true] %s15
      %s17 = sshll.u32 [#allocation2], 4
      %s18 = int_to_ptr.vmem [resolvable:$true] %s17
      %23 = dma.hbm_to_vmem [thread:$0]  %s16, 256, %s18, [#allocation3], 128, 128, 8
    $region5: #{tpu_custom_call.1} parent=1 // pred_fallthru
      _
    // Predicated region
    $region6: #{tpu_custom_call.1} parent=1 // pred_check
      _
    $region7: #{tpu_custom_call.1} parent=1 // pred_check_branch
      %25 = sbr.rel (0) target = $region9
    $region8: #{tpu_custom_call.1} parent=1 // pred_region
      %27 = vsyncadd [#allocation6], 0
      %s28 = sshll.u32 %s1, 4
      %s29 = int_to_ptr.hbm [resolvable:$true] %s28
      %s30 = sshll.u32 [#allocation5], 4
      %s31 = int_to_ptr.vmem [resolvable:$true] %s30
      %36 = dma.hbm_to_vmem [thread:$0]  %s29, 512, %s31, [#allocation6], 128, 128, 8
    $region9: #{tpu_custom_call.1} parent=1 // pred_fallthru
      _
    // Predicated region
    $region10: #{tpu_custom_call.1} parent=1 // pred_check
      _
    $region11: #{tpu_custom_call.1} parent=1 // pred_check_branch
      %38 = sbr.rel (0) target = $region13
    $region12: #{tpu_custom_call.1} parent=1 // pred_region
      _
    $region13: #{tpu_custom_call.1} parent=1 // pred_fallthru
      _
    // Predicated region
    $region14: #{tpu_custom_call.1} parent=1 // pred_check
      _
    $region15: #{tpu_custom_call.1} parent=1 // pred_check_branch
      %40 = sbr.rel (0) target = $region17
    $region16: #{tpu_custom_call.1} parent=1 // pred_region
      %42 = dma.done [#allocation3], 256
    $region17: #{tpu_custom_call.1} parent=1 // pred_fallthru
      _
    // Predicated region
    $region18: #{tpu_custom_call.1} parent=1 // pred_check
      _
    $region19: #{tpu_custom_call.1} parent=1 // pred_check_branch
      %44 = sbr.rel (0) target = $region21
    $region20: #{tpu_custom_call.1} parent=1 // pred_region
      %46 = dma.done [#allocation6], 512
    $region21: #{tpu_custom_call.1} parent=1 // pred_fallthru
      _
    %v47 = vld [vmem:[#allocation2] sm:$0xff]
    %v48 = vld [vmem:[#allocation2 + $0x8] sm:$0xff]
    %v49 = vld [vmem:[#allocation5] sm:$0xff]
    %v50 = vld [vmem:[#allocation5 + $0x8] sm:$0xff]
    %v51 = vld [vmem:[#allocation5 + $0x10] sm:$0xff]
    %v52 = vld [vmem:[#allocation5 + $0x18] sm:$0xff]
    %v53 = vld [vmem:[%s2] sm:$0x1]
    %v55 = vperm.slane %v53, 0
    %vm57 = vcmask 261120
    %v59 = vsel %vm57, %v47, 0
    %v62 = vsel %vm57, %v48, 0
    %64 = vmatpush.msra.mxu0 0.0
    %65 = vmatpush.msra.mxu0 0.0
    %66 = vmatpush.msra.mxu0 0.0
    %67 = vmatpush.msra.mxu0 0.0
    %68 = vmatpush.msra.mxu0 0.0
    %69 = vmatpush.msra.mxu0 0.0
    %70 = vmatpush.msra.mxu0 0.0
    %71 = vmatpush.msra.mxu0 0.0
    %72 = vmatpush.msra.mxu0 0.0
    %73 = vmatpush.msra.mxu0 0.0
    %74 = vmatpush.msra.mxu0 0.0
    %75 = vmatpush.msra.mxu0 0.0
    %76 = vmatpush.msra.mxu0 %v52
    %77 = vmatpush.msra.mxu0 %v51
    %78 = vmatpush.msra.mxu0 %v50
    %79 = vmatpush.msra.mxu0 %v49
    %80 = vmatmul.f32.gmra.mxu0 %v59
    %v81 = vpop.f32.mrf.mxu0
    %v82 = vadd.f32 %v55, %v81
    %83 = vmatmul.f32.gmra.mxu0 %v62
    %v84 = vpop.f32.mrf.mxu0
    %v85 = vadd.f32 %v55, %v84
    %86 = vdwg.mxu0
    %87 = vst [vmem:[#allocation7] sm:$0xff] %v82
    %88 = vst [vmem:[#allocation7 + $0x8] sm:$0xff] %v85
    // Predicated region
    $region22: #{tpu_custom_call.1} parent=1 // pred_check
      _
    $region23: #{tpu_custom_call.1} parent=1 // pred_check_branch
      %90 = sbr.rel (0) target = $region25
    $region24: #{tpu_custom_call.1} parent=1 // pred_region
      %92 = vsyncadd [#allocation4], 0
      %s93 = sshll.u32 [#allocation7], 4
      %s94 = int_to_ptr.vmem [resolvable:$true] %s93
      %s95 = sshll.u32 %s3, 4
      %s96 = int_to_ptr.hbm [resolvable:$true] %s95
      %101 = dma.vmem_to_hbm [thread:$0]  %s94, 256, %s96, [#allocation4], 128, 128, 8
    $region25: #{tpu_custom_call.1} parent=1 // pred_fallthru
      _
    // Predicated region
    $region26: #{tpu_custom_call.1} parent=1 // pred_check
      _
    $region27: #{tpu_custom_call.1} parent=1 // pred_check_branch
      %103 = sbr.rel (0) target = $region29
    $region28: #{tpu_custom_call.1} parent=1 // pred_region
      %105 = dma.done [#allocation4], 256
    $region29: #{tpu_custom_call.1} parent=1 // pred_fallthru
      _
    %106 = vsyncpa [#allocation3], 1
    %107 = vsyncpa [#allocation6], 1
    %108 = vsyncpa [#allocation4], 1

</llo_original>
